<compile_context>
chip_gen: v5e
topology: v5e:2x2
jax: 0.10.0
libtpu: 0.0.40
codegen_flags: <defaults>
</compile_context>

<pallas_src>
import functools

import jax
import jax.numpy as jnp
from jax.experimental import pallas as pl
from jax.experimental.pallas import tpu as pltpu


# ----------------------------------------------------------------------------
# Kernel 1: conv 3x3, stride 1, pad 1, + ReLU   (im2col built in VMEM)
# ----------------------------------------------------------------------------

def _conv1_kernel(x_ref, w_ref, b_ref, o_ref, *, H, W, C):
    x = x_ref[0]                                            # (H+2, W+2, C) bf16
    cols = []
    for di in range(3):
        for dj in range(3):
            cols.append(x[di:di + H, dj:dj + W, :])         # (H, W, C)
    patches = jnp.concatenate(cols, axis=-1)                # (H, W, 9*C)
    patches = patches.reshape(H * W, 9 * C)                 # collapse leading dims
    y = jnp.dot(patches, w_ref[...], preferred_element_type=jnp.float32)
    y = jnp.maximum(y + b_ref[...], 0.0)                    # (H*W, C1) f32
    o_ref[0] = y.astype(o_ref.dtype)


def conv1_relu(x_pad, w1, b1):
    """x_pad: (B, H+2, W+2, C) bf16 -> relu(conv3x3_s1(x)) as (B, H*W, C1) bf16."""
    B, Hp2, Wp2, C = x_pad.shape
    H, W = Hp2 - 2, Wp2 - 2
    C1 = w1.shape[1]
    kern = functools.partial(_conv1_kernel, H=H, W=W, C=C)
    return pl.pallas_call(
        kern,
        out_shape=jax.ShapeDtypeStruct((B, H * W, C1), jnp.bfloat16),
        grid_spec=pltpu.PrefetchScalarGridSpec(
            num_scalar_prefetch=0,
            grid=(B,),
            in_specs=[
                pl.BlockSpec((1, Hp2, Wp2, C), lambda b: (b, 0, 0, 0)),
                pl.BlockSpec((9 * C, C1), lambda b: (0, 0)),   # resident weights
                pl.BlockSpec((1, C1), lambda b: (0, 0)),
            ],
            out_specs=pl.BlockSpec((1, H * W, C1), lambda b: (b, 0, 0)),
        ),
        compiler_params=pltpu.CompilerParams(
            dimension_semantics=("parallel",),
            vmem_limit_bytes=32 * 1024 * 1024),
    )(x_pad, w1, b1)


# ----------------------------------------------------------------------------
# Kernel 2: conv 3x3 stride 2 + ReLU + 1x1 head + bilinear resize + sigmoid
#           (+ DICE partial sums in training)
# ----------------------------------------------------------------------------

def _make_head_kernel(training, *, h2, w2, C1, C2, out_h, out_w):
    def stages(ee_ref, eo_ref, oe_ref, oo_ref, w2_ref, b2_ref, w3_ref, b3_ref,
               ah_ref, awt_ref):
        # polyphase components of padded f1: (h2+1, w2+1, C1) each
        comp = {(0, 0): ee_ref[0], (0, 1): eo_ref[0],
                (1, 0): oe_ref[0], (1, 1): oo_ref[0]}
        cols = []
        for di in range(3):
            for dj in range(3):
                src = comp[(di % 2, dj % 2)]
                r0, c0 = di // 2, dj // 2
                cols.append(src[r0:r0 + h2, c0:c0 + w2, :])   # (h2, w2, C1)
        p = jnp.concatenate(cols, axis=-1).reshape(h2 * w2, 9 * C1)
        y = jnp.dot(p, w2_ref[...], preferred_element_type=jnp.float32)
        y = jnp.maximum(y + b2_ref[...], 0.0)                 # (h2*w2, C2) f32
        # fused 1x1 decoder head: VPU multiply + lane reduce (no MXU N=1 matmul,
        # no (M, 1) masked store, no logit HBM roundtrip)
        logits = jnp.sum(y.reshape(h2, w2, C2) * w3_ref[...], axis=-1) + b3_ref[0]
        # bilinear resize (f32 interpolation weights for parity) + sigmoid
        t = jnp.dot(ah_ref[...], logits, preferred_element_type=jnp.float32)
        z = jnp.dot(t, awt_ref[...], preferred_element_type=jnp.float32)
        return logits, jax.nn.sigmoid(z)                      # (h2,w2), (out_h,out_w)

    if training:
        def kernel(ee_ref, eo_ref, oe_ref, oo_ref, w2_ref, b2_ref, w3_ref, b3_ref,
                   ah_ref, awt_ref, lab_ref, logits_ref, pred_ref, dice_ref):
            logits, pred = stages(ee_ref, eo_ref, oe_ref, oo_ref, w2_ref, b2_ref,
                                  w3_ref, b3_ref, ah_ref, awt_ref)
            logits_ref[0] = logits
            pred_ref[0] = pred
            # DICE partial sums fused here: pred is never re-read from HBM.
            lab = lab_ref[0].astype(jnp.float32)              # (out_h, out_w)
            s_pl = jnp.sum(pred * lab)
            s_p = jnp.sum(pred)
            s_l = jnp.sum(lab)
            lane = jax.lax.broadcasted_iota(jnp.int32, (1, 1, 128), 2)
            dice_ref[...] = (jnp.where(lane == 0, s_pl, 0.0)
                             + jnp.where(lane == 1, s_p, 0.0)
                             + jnp.where(lane == 2, s_l, 0.0))
        return kernel

    def kernel(ee_ref, eo_ref, oe_ref, oo_ref, w2_ref, b2_ref, w3_ref, b3_ref,
               ah_ref, awt_ref, logits_ref, pred_ref):
        logits, pred = stages(ee_ref, eo_ref, oe_ref, oo_ref, w2_ref, b2_ref,
                              w3_ref, b3_ref, ah_ref, awt_ref)
        logits_ref[0] = logits
        pred_ref[0] = pred
    return kernel


def conv2_decode_resize(fee, feo, foe, foo, w2m, b2, w3row, b3, a_h, a_w_t,
                        label=None, *, training):
    B, hp, wp, C1 = fee.shape
    h2, w2 = hp - 1, wp - 1
    C2 = w2m.shape[1]
    out_h, out_w = a_h.shape[0], a_w_t.shape[1]
    kern = _make_head_kernel(training, h2=h2, w2=w2, C1=C1, C2=C2,
                             out_h=out_h, out_w=out_w)
    comp_spec = pl.BlockSpec((1, hp, wp, C1), lambda b: (b, 0, 0, 0))
    in_specs = [comp_spec, comp_spec, comp_spec, comp_spec,
                pl.BlockSpec((9 * C1, C2), lambda b: (0, 0)),   # resident weights
                pl.BlockSpec((1, C2), lambda b: (0, 0)),
                pl.BlockSpec((1, C2), lambda b: (0, 0)),
                pl.BlockSpec(memory_space=pltpu.MemorySpace.SMEM),   # b3 scalar
                pl.BlockSpec((out_h, h2), lambda b: (0, 0)),
                pl.BlockSpec((w2, out_w), lambda b: (0, 0))]
    out_shapes = [jax.ShapeDtypeStruct((B, h2, w2), jnp.float32),
                  jax.ShapeDtypeStruct((B, out_h, out_w), jnp.float32)]
    out_specs = [pl.BlockSpec((1, h2, w2), lambda b: (b, 0, 0)),
                 pl.BlockSpec((1, out_h, out_w), lambda b: (b, 0, 0))]
    args = [fee, feo, foe, foo, w2m, b2, w3row, b3, a_h, a_w_t]
    if training:
        in_specs.append(pl.BlockSpec((1, out_h, out_w), lambda b: (b, 0, 0)))
        args.append(label)
        out_shapes.append(jax.ShapeDtypeStruct((B, 1, 128), jnp.float32))
        out_specs.append(pl.BlockSpec((1, 1, 128), lambda b: (b, 0, 0)))
    return pl.pallas_call(
        kern,
        out_shape=tuple(out_shapes),
        grid_spec=pltpu.PrefetchScalarGridSpec(
            num_scalar_prefetch=0,
            grid=(B,),
            in_specs=in_specs,
            out_specs=tuple(out_specs),
        ),
        compiler_params=pltpu.CompilerParams(
            dimension_semantics=("parallel",),
            vmem_limit_bytes=32 * 1024 * 1024),
    )(*args)


# ----------------------------------------------------------------------------
# Plain-JAX glue (bilinear weight matrices, parameter setup)
# ----------------------------------------------------------------------------

def bilinear_matrix(out_size, in_size):
    """(out_size, in_size) interpolation matrix, PyTorch align_corners=False."""
    scale = in_size / out_size
    o = jnp.arange(out_size)
    src = jnp.clip((o + 0.5) * scale - 0.5, 0.0, in_size - 1)
    i0 = jnp.floor(src).astype(jnp.int32)
    i1 = jnp.minimum(i0 + 1, in_size - 1)
    w1 = src - i0.astype(jnp.float32)
    w0 = 1.0 - w1
    A = jnp.zeros((out_size, in_size), jnp.float32)
    A = A.at[o, i0].add(w0).at[o, i1].add(w1)
    return A


def init_params(key, c_in=4, c1=16, c2=32):
    k1, k2, k3 = jax.random.split(key, 3)
    return {
        # matmul-form conv weights: (kh*kw*C_in, C_out), tap-major, channel fastest
        "w1": jax.random.normal(k1, (9 * c_in, c1), jnp.float32) * 0.1,
        "b1": jnp.zeros((1, c1), jnp.float32),
        "w2": jax.random.normal(k2, (9 * c1, c2), jnp.float32) * 0.1,
        "b2": jnp.zeros((1, c2), jnp.float32),
        # 1x1 decoder head: (C2, 1)
        "w3": jax.random.normal(k3, (c2, 1), jnp.float32) * 0.1,
        "b3": jnp.zeros((1, 1), jnp.float32),
    }


# ----------------------------------------------------------------------------
# Detector forward
# ----------------------------------------------------------------------------

def detector_forward(image_nchw, params, training=False, label=None, ori_shape=None):
    x = jnp.transpose(image_nchw, (0, 2, 3, 1))             # NCHW -> NHWC once
    B, H, W, C = x.shape
    C1 = params["w1"].shape[1]

    # ---- backbone conv1 (3x3, s1, p1): only the 1x padded image goes to HBM ----
    xp = jnp.pad(x, ((0, 0), (1, 1), (1, 1), (0, 0))).astype(jnp.bfloat16)
    f1 = conv1_relu(xp, params["w1"].astype(jnp.bfloat16), params["b1"])
    f1 = f1.reshape(B, H, W, C1)                            # trivial reshape

    # ---- conv2 (3x3, s2, p1) + decoder + resize (+ DICE) fused in one kernel ----
    # Polyphase (even/odd row x col) copies of padded f1 so every stride-2 tap is a
    # contiguous VMEM slice (~1.3x f1 bytes in HBM instead of 9x im2col patches).
    # TODO(synk): odd H/W would need asymmetric polyphase padding; assumed even here.
    h2, w2 = H // 2, W // 2
    f1p = jnp.pad(f1, ((0, 0), (1, 1), (1, 1), (0, 0)))

    def phase(r, c):
        return f1p[:, r::2, c::2, :]                        # (B, h2+1, w2+1, C1)

    if training:
        out_w, out_h = W, H                                 # image.shape[3:1:-1] == (W, H)
    else:
        out_w, out_h = ori_shape                            # (width, height)
    a_h = bilinear_matrix(out_h, h2)                        # f32 interpolation weights
    a_w_t = bilinear_matrix(out_w, w2).T

    common = (phase(0, 0), phase(0, 1), phase(1, 0), phase(1, 1),
              params["w2"].astype(jnp.bfloat16), params["b2"],
              params["w3"].reshape(1, -1), params["b3"].reshape(-1),
              a_h, a_w_t)

    if training:
        lab = label.astype(jnp.bfloat16)                    # 0/1 labels exact in bf16
        logits, pred, dparts = conv2_decode_resize(*common, lab, training=True)
        parts = jnp.sum(dparts[:, 0, :3], axis=0)           # per-batch partials -> (3,)
        dice = 2.0 * parts[0] / (parts[1] + parts[2] + 1e-6)
        return {"logits": logits, "pred": pred, "DICE": dice}

    logits, pred = conv2_decode_resize(*common, training=False)
    return {"logits": logits, "pred": pred}


# ----------------------------------------------------------------------------
# Main
# ----------------------------------------------------------------------------

if __name__ == "__main__":
    key = jax.random.PRNGKey(0)
    k_img, k_lab, k_par = jax.random.split(key, 3)

    B, C, H, W = 2, 4, 16, 16
    image = jax.random.normal(k_img, (B, C, H, W), jnp.float32)       # NCHW like PyTorch
    label = (jax.random.uniform(k_lab, (B, H, W)) > 0.5).astype(jnp.float32)
    params = init_params(k_par, c_in=C)

    # training path: pred resized to image (W, H) + DICE
    ret_train = detector_forward(image, params, training=True, label=label)
    # eval path: pred resized to ori_shape given as (width, height)
    ret_eval = detector_forward(image, params, training=False, ori_shape=(W, H))

    jax.block_until_ready(ret_train["pred"])
    jax.block_until_ready(ret_train["DICE"])
    jax.block_until_ready(ret_eval["pred"])

    assert ret_train["pred"].shape == (B, H, W)
    assert ret_eval["pred"].shape == (B, H, W)
    assert ret_train["logits"].shape == (B, H // 2, W // 2)
    assert ret_train["DICE"].shape == ()
    assert bool(jnp.isfinite(ret_train["DICE"]))

    print("KERNEL_OK")
</pallas_src>

<mosaic_0001>
module attributes {stable_mosaic.version = 11 : i64} {
  func.func @_conv1_kernel(%arg0: i32, %arg1: memref<1x18x18x4xbf16, #tpu.memory_space<vmem>>, %arg2: memref<36x16xbf16, #tpu.memory_space<vmem>>, %arg3: memref<1x16xf32, #tpu.memory_space<vmem>>, %arg4: memref<1x256x16xbf16, #tpu.memory_space<vmem>>) attributes {dimension_semantics = [#tpu.dimension_semantics<parallel>], iteration_bounds = array<i64: 2>, scalar_prefetch = 0 : i64, scratch_operands = 0 : i64, tpu.core_type = #tpu.core_type<tc>, window_params = [{transform_indices = @transform_0, window_bounds = array<i64: 1, 18, 18, 4>}, {pipeline_mode = #tpu.pipeline_mode<synchronous>, transform_indices = @transform_1, window_bounds = array<i64: 36, 16>}, {pipeline_mode = #tpu.pipeline_mode<synchronous>, transform_indices = @transform_2, window_bounds = array<i64: 1, 16>}, {transform_indices = @transform_3, window_bounds = array<i64: 1, 256, 16>}]} {
    %c0 = arith.constant 0 : index
    %c0_0 = arith.constant 0 : index
    %c0_1 = arith.constant 0 : index
    %c0_2 = arith.constant 0 : index
    %0 = vector.load %arg1[%c0, %c0_0, %c0_1, %c0_2] : memref<1x18x18x4xbf16, #tpu.memory_space<vmem>>, vector<1x18x18x4xbf16>
    %1 = vector.shape_cast %0 : vector<1x18x18x4xbf16> to vector<18x18x4xbf16>
    %2 = vector.extract_strided_slice %1 {offsets = [0, 0, 0], sizes = [16, 16, 4], strides = [1, 1, 1]} : vector<18x18x4xbf16> to vector<16x16x4xbf16>
    %3 = vector.extract_strided_slice %1 {offsets = [0, 1, 0], sizes = [16, 16, 4], strides = [1, 1, 1]} : vector<18x18x4xbf16> to vector<16x16x4xbf16>
    %4 = vector.extract_strided_slice %1 {offsets = [0, 2, 0], sizes = [16, 16, 4], strides = [1, 1, 1]} : vector<18x18x4xbf16> to vector<16x16x4xbf16>
    %5 = vector.extract_strided_slice %1 {offsets = [1, 0, 0], sizes = [16, 16, 4], strides = [1, 1, 1]} : vector<18x18x4xbf16> to vector<16x16x4xbf16>
    %6 = vector.extract_strided_slice %1 {offsets = [1, 1, 0], sizes = [16, 16, 4], strides = [1, 1, 1]} : vector<18x18x4xbf16> to vector<16x16x4xbf16>
    %7 = vector.extract_strided_slice %1 {offsets = [1, 2, 0], sizes = [16, 16, 4], strides = [1, 1, 1]} : vector<18x18x4xbf16> to vector<16x16x4xbf16>
    %8 = vector.extract_strided_slice %1 {offsets = [2, 0, 0], sizes = [16, 16, 4], strides = [1, 1, 1]} : vector<18x18x4xbf16> to vector<16x16x4xbf16>
    %9 = vector.extract_strided_slice %1 {offsets = [2, 1, 0], sizes = [16, 16, 4], strides = [1, 1, 1]} : vector<18x18x4xbf16> to vector<16x16x4xbf16>
    %10 = vector.extract_strided_slice %1 {offsets = [2, 2, 0], sizes = [16, 16, 4], strides = [1, 1, 1]} : vector<18x18x4xbf16> to vector<16x16x4xbf16>
    %11 = tpu.concatenate %2, %3, %4, %5, %6, %7, %8, %9, %10 in 2 : vector<16x16x4xbf16>, vector<16x16x4xbf16>, vector<16x16x4xbf16>, vector<16x16x4xbf16>, vector<16x16x4xbf16>, vector<16x16x4xbf16>, vector<16x16x4xbf16>, vector<16x16x4xbf16>, vector<16x16x4xbf16> -> vector<16x16x36xbf16>
    %12 = vector.shape_cast %11 : vector<16x16x36xbf16> to vector<256x36xbf16>
    %c0_3 = arith.constant 0 : index
    %c0_4 = arith.constant 0 : index
    %13 = vector.load %arg2[%c0_3, %c0_4] : memref<36x16xbf16, #tpu.memory_space<vmem>>, vector<36x16xbf16>
    %cst = arith.constant dense<0.000000e+00> : vector<256x16xf32>
    %14 = tpu.matmul %12, %13, %cst {dimension_numbers = #tpu.dot_dimension_numbers<[1], [0], [0], [1], [0, 0, 1, 1], [], []>} : vector<256x36xbf16>, vector<36x16xbf16>, vector<256x16xf32> -> vector<256x16xf32>
    %c0_5 = arith.constant 0 : index
    %c0_6 = arith.constant 0 : index
    %15 = vector.load %arg3[%c0_5, %c0_6] : memref<1x16xf32, #tpu.memory_space<vmem>>, vector<1x16xf32>
    %16 = vector.broadcast %15 : vector<1x16xf32> to vector<256x16xf32>
    %17 = arith.addf %14, %16 : vector<256x16xf32>
    %cst_7 = arith.constant 0.000000e+00 : f32
    %18 = vector.broadcast %cst_7 : f32 to vector<256x16xf32>
    %19 = arith.maximumf %17, %18 : vector<256x16xf32>
    %20 = arith.truncf %19 : vector<256x16xf32> to vector<256x16xbf16>
    %c0_8 = arith.constant 0 : index
    %c0_9 = arith.constant 0 : index
    %c0_10 = arith.constant 0 : index
    %21 = vector.load %arg4[%c0_8, %c0_9, %c0_10] : memref<1x256x16xbf16, #tpu.memory_space<vmem>>, vector<1x256x16xbf16>
    %22 = vector.shape_cast %21 : vector<1x256x16xbf16> to vector<256x16xbf16>
    %23 = vector.shape_cast %20 : vector<256x16xbf16> to vector<1x256x16xbf16>
    tpu.vector_store %arg4[%c0_8, %c0_9, %c0_10], %23 {strides = array<i32>} : memref<1x256x16xbf16, #tpu.memory_space<vmem>>, vector<1x256x16xbf16>,
    return
  }
  func.func @transform_0(%arg0: i32) -> (i32, i32, i32, i32) {
    %c0_i32 = arith.constant 0 : i32
    %c0_i32_0 = arith.constant 0 : i32
    %c0_i32_1 = arith.constant 0 : i32
    %c0_i32_2 = arith.constant 0 : i32
    return %arg0, %c0_i32, %c0_i32_0, %c0_i32_1 : i32, i32, i32, i32
  }
  func.func @transform_1(%arg0: i32) -> (i32, i32) {
    %c0_i32 = arith.constant 0 : i32
    %c0_i32_0 = arith.constant 0 : i32
    %c0_i32_1 = arith.constant 0 : i32
    return %c0_i32, %c0_i32_0 : i32, i32
  }
  func.func @transform_2(%arg0: i32) -> (i32, i32) {
    %c0_i32 = arith.constant 0 : i32
    %c0_i32_0 = arith.constant 0 : i32
    %c0_i32_1 = arith.constant 0 : i32
    return %c0_i32, %c0_i32_0 : i32, i32
  }
  func.func @transform_3(%arg0: i32) -> (i32, i32, i32) {
    %c0_i32 = arith.constant 0 : i32
    %c0_i32_0 = arith.constant 0 : i32
    %c0_i32_1 = arith.constant 0 : i32
    return %arg0, %c0_i32, %c0_i32_0 : i32, i32, i32
  }
}

</mosaic_0001>

<llo_original>
// kernel: tpu_custom_call.1
$region0: #{tpu_custom_call.1}
  #allocation0 [shape = 'u32[]', space=smem, size = 0x4, offset = 0x4, fixed_abs, tag = 'smem constant byte address 0x4 - core index']
  #allocation1 [shape = 'u32[72,128]{1,0:T(1,128)}', space=vmem, size = 0x9000, scoped, tag = 'internal scratch']
  %s0 = inlined_call_operand.vmem [shape: bf16[2,18,18,4], index: 0, kind: input, shape index: {}]
  %s1 = inlined_call_operand.vmem [shape: bf16[36,16], index: 1, kind: input, shape index: {}]
  %s2 = inlined_call_operand.vmem [shape: f32[1,16], index: 2, kind: input, shape index: {}]
  %s3 = inlined_call_operand.vmem [shape: bf16[2,256,16], index: 3, kind: output, shape index: {}]
  %s4 = sld [smem:[#allocation0]]
  $region45: #{tpu_custom_call.1} parent=0
    _
  %s6 = ssub.s32 1, %s4
  %s7 = scalar_select 0, %s6, %s4
  loop: start=0, step=1, limit=4
  $region2: #{tpu_custom_call.1} parent=0 // loop_pre_header
    _
  $region3: #{tpu_custom_call.1} parent=0 // loop_header
    %s9 = sphi 0, %s13
    %p10 = scmp.ge.s32.totalorder %s9, 4
    %s19 = sphi 0, %s21
    %s22 = sphi 0, %s19
    %s23 = sphi 0, %s22
    %s39 = sphi 0, %s23
    %s43 = sphi 0, %s43
    %s45 = sphi 0, %s43
    %s46 = sphi 0, %s45
    %s60 = sphi 0, %s46
    %s64 = sphi 0, %s64
    %s66 = sphi 0, %s64
    %s67 = sphi 0, %s66
    %s81 = sphi 0, %s67
    %s87 = sphi 0, %s89
    %s90 = sphi 0, %s87
    %s91 = sphi 0, %s90
    %s107 = sphi 0, %s91
  $region4: #{tpu_custom_call.1} parent=0 // loop_header_branch
    %12 = sbr.rel (%p10) target = $region8
  $region5: #{tpu_custom_call.1} parent=0 // loop_body
    %s14 = ssub.s32 %s9, 1
    %s15 = ssub.s32 %s9, 2
    %s16 = sadd.s32 %s9, 1
    %s17 = ssub.s32 %s9, %s16
    %p18 = scmp.eq.s32.totalorder %s17, 0
    %s20 = sadd.s32 %s19, 1
    %s21 = scalar_select %p18, %s19, %s20
    %p24 = pneg %p18
    %p25 = scmp.eq.s32.totalorder %s9, 1
    %p26 = por %p24, %p25
    %p27 = scmp.ne.s32.totalorder %s19, %s22
    %p28 = scmp.eq.s32.totalorder %s9, 0
    %p29 = por %p27, %p28
    %p30 = scmp.ne.s32.totalorder %s19, %s22
    %p31 = scmp.eq.s32.totalorder %s14, 1
    %p32 = por %p30, %p31
    %p33 = scmp.ne.s32.totalorder %s22, %s23
    %p34 = scmp.eq.s32.totalorder %s14, 0
    %p35 = por %p33, %p34
    %p36 = scmp.ne.s32.totalorder %s22, %s23
    %p37 = scmp.eq.s32.totalorder %s15, 1
    %p38 = por %p36, %p37
    %p40 = scmp.ne.s32.totalorder %s23, %s39
    %p41 = scmp.eq.s32.totalorder %s15, 0
    %p42 = por %p40, %p41
    %s44 = sadd.s32 %s43, 1
    %p47 = scmp.eq.s32.totalorder %s9, 1
    %p48 = scmp.ne.s32.totalorder %s43, %s45
    %p49 = scmp.eq.s32.totalorder %s9, 0
    %p50 = por %p48, %p49
    %p51 = scmp.ne.s32.totalorder %s43, %s45
    %p52 = scmp.eq.s32.totalorder %s14, 1
    %p53 = por %p51, %p52
    %p54 = scmp.ne.s32.totalorder %s45, %s46
    %p55 = scmp.eq.s32.totalorder %s14, 0
    %p56 = por %p54, %p55
    %p57 = scmp.ne.s32.totalorder %s45, %s46
    %p58 = scmp.eq.s32.totalorder %s15, 1
    %p59 = por %p57, %p58
    %p61 = scmp.ne.s32.totalorder %s46, %s60
    %p62 = scmp.eq.s32.totalorder %s15, 0
    %p63 = por %p61, %p62
    %s65 = sadd.s32 %s64, 1
    %p68 = scmp.eq.s32.totalorder %s9, 1
    %p69 = scmp.ne.s32.totalorder %s64, %s66
    %p70 = scmp.eq.s32.totalorder %s9, 0
    %p71 = por %p69, %p70
    %p72 = scmp.ne.s32.totalorder %s64, %s66
    %p73 = scmp.eq.s32.totalorder %s14, 1
    %p74 = por %p72, %p73
    %p75 = scmp.ne.s32.totalorder %s66, %s67
    %p76 = scmp.eq.s32.totalorder %s14, 0
    %p77 = por %p75, %p76
    %p78 = scmp.ne.s32.totalorder %s66, %s67
    %p79 = scmp.eq.s32.totalorder %s15, 1
    %p80 = por %p78, %p79
    %p82 = scmp.ne.s32.totalorder %s67, %s81
    %p83 = scmp.eq.s32.totalorder %s15, 0
    %p84 = por %p82, %p83
    %s85 = ssub.s32 %s9, %s16
    %p86 = scmp.eq.s32.totalorder %s85, 0
    %s88 = sadd.s32 %s87, 1
    %s89 = scalar_select %p86, %s87, %s88
    %p92 = pneg %p86
    %p93 = scmp.eq.s32.totalorder %s9, 1
    %p94 = por %p92, %p93
    %p95 = scmp.ne.s32.totalorder %s87, %s90
    %p96 = scmp.eq.s32.totalorder %s9, 0
    %p97 = por %p95, %p96
    %p98 = scmp.ne.s32.totalorder %s87, %s90
    %p99 = scmp.eq.s32.totalorder %s14, 1
    %p100 = por %p98, %p99
    %p101 = scmp.ne.s32.totalorder %s90, %s91
    %p102 = scmp.eq.s32.totalorder %s14, 0
    %p103 = por %p101, %p102
    %p104 = scmp.ne.s32.totalorder %s90, %s91
    %p105 = scmp.eq.s32.totalorder %s15, 1
    %p106 = por %p104, %p105
    %p108 = scmp.ne.s32.totalorder %s91, %s107
    %p109 = scmp.eq.s32.totalorder %s15, 0
    %p110 = por %p108, %p109
    %p111 = scmp.le.s32.totalorder 1, %s9
    %p112 = scmp.lt.s32.totalorder %s9, 3
    %p113 = pnand %p111, %p112
    %p114 = pneg %p113
    // Predicated region
    $region9: #{tpu_custom_call.1} parent=5 // pred_check
      _
    $region10: #{tpu_custom_call.1} parent=5 // pred_check_branch
      %116 = sbr.rel (%p113) target = $region12
    $region11: #{tpu_custom_call.1} parent=5 // pred_region
      %s117 = ssub.s32 %s9, 1
      // Predicated region
      $region13: #{tpu_custom_call.1} parent=11 // pred_check
        %p118 = pneg %p56
      $region14: #{tpu_custom_call.1} parent=11 // pred_check_branch
        %120 = sbr.rel (%p118) target = $region16
      $region15: #{tpu_custom_call.1} parent=11 // pred_region
        _
      $region16: #{tpu_custom_call.1} parent=11 // pred_fallthru
        _
      // Predicated region
      $region17: #{tpu_custom_call.1} parent=11 // pred_check
        %p121 = pneg %p77
      $region18: #{tpu_custom_call.1} parent=11 // pred_check_branch
        %123 = sbr.rel (%p121) target = $region20
      $region19: #{tpu_custom_call.1} parent=11 // pred_region
        _
      $region20: #{tpu_custom_call.1} parent=11 // pred_fallthru
        _
    $region12: #{tpu_custom_call.1} parent=5 // pred_fallthru
      _
    %p124 = scmp.lt.s32.totalorder %s9, 2
    // Predicated region
    $region21: #{tpu_custom_call.1} parent=5 // pred_check
      %p125 = pneg %p124
    $region22: #{tpu_custom_call.1} parent=5 // pred_check_branch
      %127 = sbr.rel (%p125) target = $region24
    $region23: #{tpu_custom_call.1} parent=5 // pred_region
      // Predicated region
      $region25: #{tpu_custom_call.1} parent=23 // pred_check
        %p128 = pneg %p29
      $region26: #{tpu_custom_call.1} parent=23 // pred_check_branch
        %130 = sbr.rel (%p128) target = $region28
      $region27: #{tpu_custom_call.1} parent=23 // pred_region
        %p131 = scmp.lt.s32.totalorder %s9, 1
        %s132 = scalar_select %p131, %s9, 1
        %s133 = smul.addr %s132, 54
        %s134 = smul.addr %s133, 4
        %s135 = scalar_lea.vmem %s0, %s134
      $region28: #{tpu_custom_call.1} parent=23 // pred_fallthru
        _
    $region24: #{tpu_custom_call.1} parent=5 // pred_fallthru
      _
    %p136 = scmp.le.s32.totalorder 1, %s9
    %p137 = scmp.lt.s32.totalorder %s9, 3
    %p138 = pnand %p136, %p137
    %p139 = pneg %p138
    // Predicated region
    $region29: #{tpu_custom_call.1} parent=5 // pred_check
      _
    $region30: #{tpu_custom_call.1} parent=5 // pred_check_branch
      %141 = sbr.rel (%p138) target = $region32
    $region31: #{tpu_custom_call.1} parent=5 // pred_region
      %s142 = ssub.s32 %s9, 1
      %p143 = scmp.lt.s32.totalorder %s14, 1
      %s144 = scalar_select %p143, %s14, 1
      %s145 = smul.addr %s144, 54
      %s146 = smul.addr %s145, 4
      %s147 = scalar_lea.vmem %s0, %s146
      %p148 = pneg %p35
      %p149 = pneg %p32
      %p150 = pneg %p56
      %p151 = pneg %p53
      %p152 = pneg %p77
      %p153 = pneg %p74
      %p154 = pneg %p103
      %p155 = pneg %p100
      %p156 = scmp.lt.s32.totalorder %s14, 1
      %s157 = scalar_select %p156, %s14, 1
      %s158 = smul.addr %s157, 32
      %s159 = smul.addr %s158, 4
      %s160 = scalar_lea.vmem %s3, %s159
      %p161 = scmp.lt.s32.totalorder %s14, 1
      %s162 = scalar_select %p161, %s14, 1
      %s163 = smul.addr %s162, 54
      %s164 = smul.addr %s163, 4
      %s165 = scalar_lea.vmem %s0, %s164
      %p166 = scmp.lt.s32.totalorder %s14, 1
      %s167 = scalar_select %p166, %s14, 1
      %s168 = smul.addr %s167, 32
      %s169 = smul.addr %s168, 4
      %s170 = scalar_lea.vmem %s3, %s169
      %v172 = vld [vmem:[%s165] sm:$0xf]
      %v173 = vld [vmem:[%s165 + $0x4] sm:$0xf]
      %v174 = vld [vmem:[%s165 + $0x8] sm:$0x1]
      %v175 = vld [vmem:[%s165 + $0xc] sm:$0xf]
      %v176 = vld [vmem:[%s165 + $0x10] sm:$0xf]
      %v177 = vld [vmem:[%s165 + $0x14] sm:$0x1]
      %v178 = vld [vmem:[%s165 + $0x18] sm:$0xf]
      %v179 = vld [vmem:[%s165 + $0x1c] sm:$0xf]
      %v180 = vld [vmem:[%s165 + $0x20] sm:$0x1]
      %v181 = vld [vmem:[%s165 + $0x24] sm:$0xf]
      %v182 = vld [vmem:[%s165 + $0x28] sm:$0xf]
      %v183 = vld [vmem:[%s165 + $0x2c] sm:$0x1]
      %v184 = vld [vmem:[%s165 + $0x30] sm:$0xf]
      %v185 = vld [vmem:[%s165 + $0x34] sm:$0xf]
      %v186 = vld [vmem:[%s165 + $0x38] sm:$0x1]
      %v187 = vld [vmem:[%s165 + $0x3c] sm:$0xf]
      %v188 = vld [vmem:[%s165 + $0x40] sm:$0xf]
      %v189 = vld [vmem:[%s165 + $0x44] sm:$0x1]
      %v190 = vld [vmem:[%s165 + $0x48] sm:$0xf]
      %v191 = vld [vmem:[%s165 + $0x4c] sm:$0xf]
      %v192 = vld [vmem:[%s165 + $0x50] sm:$0x1]
      %v193 = vld [vmem:[%s165 + $0x54] sm:$0xf]
      %v194 = vld [vmem:[%s165 + $0x58] sm:$0xf]
      %v195 = vld [vmem:[%s165 + $0x5c] sm:$0x1]
      %v196 = vld [vmem:[%s165 + $0x60] sm:$0xf]
      %v197 = vld [vmem:[%s165 + $0x64] sm:$0xf]
      %v198 = vld [vmem:[%s165 + $0x68] sm:$0x1]
      %v199 = vld [vmem:[%s165 + $0x6c] sm:$0xf]
      %v200 = vld [vmem:[%s165 + $0x70] sm:$0xf]
      %v201 = vld [vmem:[%s165 + $0x74] sm:$0x1]
      %v202 = vld [vmem:[%s165 + $0x78] sm:$0xf]
      %v203 = vld [vmem:[%s165 + $0x7c] sm:$0xf]
      %v204 = vld [vmem:[%s165 + $0x80] sm:$0x1]
      %v205 = vld [vmem:[%s165 + $0x84] sm:$0xf]
      %v206 = vld [vmem:[%s165 + $0x88] sm:$0xf]
      %v207 = vld [vmem:[%s165 + $0x8c] sm:$0x1]
      %v208 = vld [vmem:[%s165 + $0x90] sm:$0xf]
      %v209 = vld [vmem:[%s165 + $0x94] sm:$0xf]
      %v210 = vld [vmem:[%s165 + $0x98] sm:$0x1]
      %v211 = vld [vmem:[%s165 + $0x9c] sm:$0xf]
      %v212 = vld [vmem:[%s165 + $0xa0] sm:$0xf]
      %v213 = vld [vmem:[%s165 + $0xa4] sm:$0x1]
      %v214 = vld [vmem:[%s165 + $0xa8] sm:$0xf]
      %v215 = vld [vmem:[%s165 + $0xac] sm:$0xf]
      %v216 = vld [vmem:[%s165 + $0xb0] sm:$0x1]
      %v217 = vld [vmem:[%s165 + $0xb4] sm:$0xf]
      %v218 = vld [vmem:[%s165 + $0xb8] sm:$0xf]
      %v219 = vld [vmem:[%s165 + $0xbc] sm:$0x1]
      %v220 = vld [vmem:[%s165 + $0xc0] sm:$0xf]
      %v221 = vld [vmem:[%s165 + $0xc4] sm:$0xf]
      %v222 = vld [vmem:[%s165 + $0xc8] sm:$0x1]
      %v223 = vld [vmem:[%s165 + $0xcc] sm:$0xf]
      %v224 = vld [vmem:[%s165 + $0xd0] sm:$0xf]
      %v225 = vld [vmem:[%s165 + $0xd4] sm:$0x1]
      %v258 = vunpack.c.l.b16 %v172
      %v259 = vunpack.c.l.b16 %v173
      %v260 = vunpack.c.l.b16 %v175
      %v261 = vunpack.c.l.b16 %v176
      %v262 = vunpack.c.l.b16 %v178
      %v263 = vunpack.c.l.b16 %v179
      %v264 = vunpack.c.l.b16 %v181
      %v265 = vunpack.c.l.b16 %v182
      %v266 = vunpack.c.l.b16 %v184
      %v267 = vunpack.c.l.b16 %v185
      %v268 = vunpack.c.l.b16 %v187
      %v269 = vunpack.c.l.b16 %v188
      %v270 = vunpack.c.l.b16 %v190
      %v271 = vunpack.c.l.b16 %v191
      %v272 = vunpack.c.l.b16 %v193
      %v273 = vunpack.c.l.b16 %v194
      %v274 = vunpack.c.l.b16 %v196
      %v275 = vunpack.c.l.b16 %v197
      %v276 = vunpack.c.l.b16 %v199
      %v277 = vunpack.c.l.b16 %v200
      %v278 = vunpack.c.l.b16 %v202
      %v279 = vunpack.c.l.b16 %v203
      %v280 = vunpack.c.l.b16 %v205
      %v281 = vunpack.c.l.b16 %v206
      %v282 = vunpack.c.l.b16 %v208
      %v283 = vunpack.c.l.b16 %v209
      %v284 = vunpack.c.l.b16 %v211
      %v285 = vunpack.c.l.b16 %v212
      %v286 = vunpack.c.l.b16 %v214
      %v287 = vunpack.c.l.b16 %v215
      %v288 = vunpack.c.l.b16 %v217
      %v289 = vunpack.c.l.b16 %v218
      %v290 = vpack.c.b16 %v259, %v258
      %v291 = vpack.c.b16 %v261, %v260
      %v292 = vpack.c.b16 %v263, %v262
      %v293 = vpack.c.b16 %v265, %v264
      %v294 = vpack.c.b16 %v267, %v266
      %v295 = vpack.c.b16 %v269, %v268
      %v296 = vpack.c.b16 %v271, %v270
      %v297 = vpack.c.b16 %v273, %v272
      %v298 = vpack.c.b16 %v275, %v274
      %v299 = vpack.c.b16 %v277, %v276
      %v300 = vpack.c.b16 %v279, %v278
      %v301 = vpack.c.b16 %v281, %v280
      %v302 = vpack.c.b16 %v283, %v282
      %v303 = vpack.c.b16 %v285, %v284
      %v304 = vpack.c.b16 %v287, %v286
      %v305 = vpack.c.b16 %v289, %v288
      %v322 = vunpack.c.l.b16 %v174
      %v323 = vunpack.c.l.b16 %v177
      %v324 = vunpack.c.l.b16 %v180
      %v325 = vunpack.c.l.b16 %v183
      %v326 = vunpack.c.l.b16 %v186
      %v327 = vunpack.c.l.b16 %v189
      %v328 = vunpack.c.l.b16 %v192
      %v329 = vunpack.c.l.b16 %v195
      %v330 = vunpack.c.l.b16 %v198
      %v331 = vunpack.c.l.b16 %v201
      %v332 = vunpack.c.l.b16 %v204
      %v333 = vunpack.c.l.b16 %v207
      %v334 = vunpack.c.l.b16 %v210
      %v335 = vunpack.c.l.b16 %v213
      %v336 = vunpack.c.l.b16 %v216
      %v337 = vunpack.c.l.b16 %v219
      %v338 = vpack.c.b16 %v322, %v322
      %v339 = vpack.c.b16 %v323, %v323
      %v340 = vpack.c.b16 %v324, %v324
      %v341 = vpack.c.b16 %v325, %v325
      %v342 = vpack.c.b16 %v326, %v326
      %v343 = vpack.c.b16 %v327, %v327
      %v344 = vpack.c.b16 %v328, %v328
      %v345 = vpack.c.b16 %v329, %v329
      %v346 = vpack.c.b16 %v330, %v330
      %v347 = vpack.c.b16 %v331, %v331
      %v348 = vpack.c.b16 %v332, %v332
      %v349 = vpack.c.b16 %v333, %v333
      %v350 = vpack.c.b16 %v334, %v334
      %v351 = vpack.c.b16 %v335, %v335
      %v352 = vpack.c.b16 %v336, %v336
      %v353 = vpack.c.b16 %v337, %v337
      %vm354 = vsmask.f32 7424
      %v356 = vshrl.u32 %v290, 16
      %v358 = vshll.u32 %v290, 16
      %v360 = vrot.slane %v358, 1
      %v361 = vor.u32 %v356, %v360
      %v363 = vshll.u32 %v338, 16
      %v365 = vrot.slane %v363, 1
      %v366 = vsel %vm354, %v361, %v365
      %v368 = vshrl.u32 %v291, 16
      %v370 = vshll.u32 %v291, 16
      %v372 = vrot.slane %v370, 1
      %v373 = vor.u32 %v368, %v372
      %v375 = vshll.u32 %v339, 16
      %v377 = vrot.slane %v375, 1
      %v378 = vsel %vm354, %v373, %v377
      %v380 = vshrl.u32 %v292, 16
      %v382 = vshll.u32 %v292, 16
      %v384 = vrot.slane %v382, 1
      %v385 = vor.u32 %v380, %v384
      %v387 = vshll.u32 %v340, 16
      %v389 = vrot.slane %v387, 1
      %v390 = vsel %vm354, %v385, %v389
      %v392 = vshrl.u32 %v293, 16
      %v394 = vshll.u32 %v293, 16
      %v396 = vrot.slane %v394, 1
      %v397 = vor.u32 %v392, %v396
      %v399 = vshll.u32 %v341, 16
      %v401 = vrot.slane %v399, 1
      %v402 = vsel %vm354, %v397, %v401
      %v404 = vshrl.u32 %v294, 16
      %v406 = vshll.u32 %v294, 16
      %v408 = vrot.slane %v406, 1
      %v409 = vor.u32 %v404, %v408
      %v411 = vshll.u32 %v342, 16
      %v413 = vrot.slane %v411, 1
      %v414 = vsel %vm354, %v409, %v413
      %v416 = vshrl.u32 %v295, 16
      %v418 = vshll.u32 %v295, 16
      %v420 = vrot.slane %v418, 1
      %v421 = vor.u32 %v416, %v420
      %v423 = vshll.u32 %v343, 16
      %v425 = vrot.slane %v423, 1
      %v426 = vsel %vm354, %v421, %v425
      %v428 = vshrl.u32 %v296, 16
      %v430 = vshll.u32 %v296, 16
      %v432 = vrot.slane %v430, 1
      %v433 = vor.u32 %v428, %v432
      %v435 = vshll.u32 %v344, 16
      %v437 = vrot.slane %v435, 1
      %v438 = vsel %vm354, %v433, %v437
      %v440 = vshrl.u32 %v297, 16
      %v442 = vshll.u32 %v297, 16
      %v444 = vrot.slane %v442, 1
      %v445 = vor.u32 %v440, %v444
      %v447 = vshll.u32 %v345, 16
      %v449 = vrot.slane %v447, 1
      %v450 = vsel %vm354, %v445, %v449
      %v452 = vshrl.u32 %v298, 16
      %v454 = vshll.u32 %v298, 16
      %v456 = vrot.slane %v454, 1
      %v457 = vor.u32 %v452, %v456
      %v459 = vshll.u32 %v346, 16
      %v461 = vrot.slane %v459, 1
      %v462 = vsel %vm354, %v457, %v461
      %v464 = vshrl.u32 %v299, 16
      %v466 = vshll.u32 %v299, 16
      %v468 = vrot.slane %v466, 1
      %v469 = vor.u32 %v464, %v468
      %v471 = vshll.u32 %v347, 16
      %v473 = vrot.slane %v471, 1
      %v474 = vsel %vm354, %v469, %v473
      %v476 = vshrl.u32 %v300, 16
      %v478 = vshll.u32 %v300, 16
      %v480 = vrot.slane %v478, 1
      %v481 = vor.u32 %v476, %v480
      %v483 = vshll.u32 %v348, 16
      %v485 = vrot.slane %v483, 1
      %v486 = vsel %vm354, %v481, %v485
      %v488 = vshrl.u32 %v301, 16
      %v490 = vshll.u32 %v301, 16
      %v492 = vrot.slane %v490, 1
      %v493 = vor.u32 %v488, %v492
      %v495 = vshll.u32 %v349, 16
      %v497 = vrot.slane %v495, 1
      %v498 = vsel %vm354, %v493, %v497
      %v500 = vshrl.u32 %v302, 16
      %v502 = vshll.u32 %v302, 16
      %v504 = vrot.slane %v502, 1
      %v505 = vor.u32 %v500, %v504
      %v507 = vshll.u32 %v350, 16
      %v509 = vrot.slane %v507, 1
      %v510 = vsel %vm354, %v505, %v509
      %v512 = vshrl.u32 %v303, 16
      %v514 = vshll.u32 %v303, 16
      %v516 = vrot.slane %v514, 1
      %v517 = vor.u32 %v512, %v516
      %v519 = vshll.u32 %v351, 16
      %v521 = vrot.slane %v519, 1
      %v522 = vsel %vm354, %v517, %v521
      %v524 = vshrl.u32 %v304, 16
      %v526 = vshll.u32 %v304, 16
      %v528 = vrot.slane %v526, 1
      %v529 = vor.u32 %v524, %v528
      %v531 = vshll.u32 %v352, 16
      %v533 = vrot.slane %v531, 1
      %v534 = vsel %vm354, %v529, %v533
      %v536 = vshrl.u32 %v305, 16
      %v538 = vshll.u32 %v305, 16
      %v540 = vrot.slane %v538, 1
      %v541 = vor.u32 %v536, %v540
      %v543 = vshll.u32 %v353, 16
      %v545 = vrot.slane %v543, 1
      %v546 = vsel %vm354, %v541, %v545
      %547 = vrot.lane.b32.xlu0 %v366, 4
      %v548 = vpop.permute.xlu0 %547
      %549 = vrot.lane.b32.xlu0 %v378, 4
      %v550 = vpop.permute.xlu0 %549
      %551 = vrot.lane.b32.xlu0 %v390, 4
      %v552 = vpop.permute.xlu0 %551
      %553 = vrot.lane.b32.xlu0 %v402, 4
      %v554 = vpop.permute.xlu0 %553
      %555 = vrot.lane.b32.xlu0 %v414, 4
      %v556 = vpop.permute.xlu0 %555
      %557 = vrot.lane.b32.xlu0 %v426, 4
      %v558 = vpop.permute.xlu0 %557
      %559 = vrot.lane.b32.xlu0 %v438, 4
      %v560 = vpop.permute.xlu0 %559
      %561 = vrot.lane.b32.xlu0 %v450, 4
      %v562 = vpop.permute.xlu0 %561
      %563 = vrot.lane.b32.xlu0 %v462, 4
      %v564 = vpop.permute.xlu0 %563
      %565 = vrot.lane.b32.xlu0 %v474, 4
      %v566 = vpop.permute.xlu0 %565
      %567 = vrot.lane.b32.xlu0 %v486, 4
      %v568 = vpop.permute.xlu0 %567
      %569 = vrot.lane.b32.xlu0 %v498, 4
      %v570 = vpop.permute.xlu0 %569
      %571 = vrot.lane.b32.xlu0 %v510, 4
      %v572 = vpop.permute.xlu0 %571
      %573 = vrot.lane.b32.xlu0 %v522, 4
      %v574 = vpop.permute.xlu0 %573
      %575 = vrot.lane.b32.xlu0 %v534, 4
      %v576 = vpop.permute.xlu0 %575
      %577 = vrot.lane.b32.xlu0 %v546, 4
      %v578 = vpop.permute.xlu0 %577
      %vm579 = vcmask 1046528
      %v580 = vrot.slane %v290, 1
      %v581 = vrot.slane %v338, 1
      %v582 = vsel %vm579, %v580, %v581
      %v583 = vrot.slane %v291, 1
      %v584 = vrot.slane %v339, 1
      %v585 = vsel %vm579, %v583, %v584
      %v586 = vrot.slane %v292, 1
      %v587 = vrot.slane %v340, 1
      %v588 = vsel %vm579, %v586, %v587
      %v589 = vrot.slane %v293, 1
      %v590 = vrot.slane %v341, 1
      %v591 = vsel %vm579, %v589, %v590
      %v592 = vrot.slane %v294, 1
      %v593 = vrot.slane %v342, 1
      %v594 = vsel %vm579, %v592, %v593
      %v595 = vrot.slane %v295, 1
      %v596 = vrot.slane %v343, 1
      %v597 = vsel %vm579, %v595, %v596
      %v598 = vrot.slane %v296, 1
      %v599 = vrot.slane %v344, 1
      %v600 = vsel %vm579, %v598, %v599
      %v601 = vrot.slane %v297, 1
      %v602 = vrot.slane %v345, 1
      %v603 = vsel %vm579, %v601, %v602
      %v604 = vrot.slane %v298, 1
      %v605 = vrot.slane %v346, 1
      %v606 = vsel %vm579, %v604, %v605
      %v607 = vrot.slane %v299, 1
      %v608 = vrot.slane %v347, 1
      %v609 = vsel %vm579, %v607, %v608
      %v610 = vrot.slane %v300, 1
      %v611 = vrot.slane %v348, 1
      %v612 = vsel %vm579, %v610, %v611
      %v613 = vrot.slane %v301, 1
      %v614 = vrot.slane %v349, 1
      %v615 = vsel %vm579, %v613, %v614
      %v616 = vrot.slane %v302, 1
      %v617 = vrot.slane %v350, 1
      %v618 = vsel %vm579, %v616, %v617
      %v619 = vrot.slane %v303, 1
      %v620 = vrot.slane %v351, 1
      %v621 = vsel %vm579, %v619, %v620
      %v622 = vrot.slane %v304, 1
      %v623 = vrot.slane %v352, 1
      %v624 = vsel %vm579, %v622, %v623
      %v625 = vrot.slane %v305, 1
      %v626 = vrot.slane %v353, 1
      %v627 = vsel %vm579, %v625, %v626
      %628 = vrot.lane.b32.xlu0 %v582, 8
      %v629 = vpop.permute.xlu0 %628
      %630 = vrot.lane.b32.xlu0 %v585, 8
      %v631 = vpop.permute.xlu0 %630
      %632 = vrot.lane.b32.xlu0 %v588, 8
      %v633 = vpop.permute.xlu0 %632
      %634 = vrot.lane.b32.xlu0 %v591, 8
      %v635 = vpop.permute.xlu0 %634
      %636 = vrot.lane.b32.xlu0 %v594, 8
      %v637 = vpop.permute.xlu0 %636
      %638 = vrot.lane.b32.xlu0 %v597, 8
      %v639 = vpop.permute.xlu0 %638
      %640 = vrot.lane.b32.xlu0 %v600, 8
      %v641 = vpop.permute.xlu0 %640
      %642 = vrot.lane.b32.xlu0 %v603, 8
      %v643 = vpop.permute.xlu0 %642
      %644 = vrot.lane.b32.xlu0 %v606, 8
      %v645 = vpop.permute.xlu0 %644
      %646 = vrot.lane.b32.xlu0 %v609, 8
      %v647 = vpop.permute.xlu0 %646
      %648 = vrot.lane.b32.xlu0 %v612, 8
      %v649 = vpop.permute.xlu0 %648
      %650 = vrot.lane.b32.xlu0 %v615, 8
      %v651 = vpop.permute.xlu0 %650
      %652 = vrot.lane.b32.xlu0 %v618, 8
      %v653 = vpop.permute.xlu0 %652
      %654 = vrot.lane.b32.xlu0 %v621, 8
      %v655 = vpop.permute.xlu0 %654
      %656 = vrot.lane.b32.xlu0 %v624, 8
      %v657 = vpop.permute.xlu0 %656
      %658 = vrot.lane.b32.xlu0 %v627, 8
      %v659 = vpop.permute.xlu0 %658
      %v662 = vunpack.c.l.b16 %v220
      %v663 = vunpack.c.l.b16 %v221
      %v664 = vpack.c.b16 %v663, %v662
      %665 = vrot.lane.b32.xlu0 %v291, 12
      %v666 = vpop.permute.xlu0 %665
      %667 = vrot.lane.b32.xlu0 %v292, 12
      %v668 = vpop.permute.xlu0 %667
      %669 = vrot.lane.b32.xlu0 %v293, 12
      %v670 = vpop.permute.xlu0 %669
      %671 = vrot.lane.b32.xlu0 %v294, 12
      %v672 = vpop.permute.xlu0 %671
      %673 = vrot.lane.b32.xlu0 %v295, 12
      %v674 = vpop.permute.xlu0 %673
      %675 = vrot.lane.b32.xlu0 %v296, 12
      %v676 = vpop.permute.xlu0 %675
      %677 = vrot.lane.b32.xlu0 %v297, 12
      %v678 = vpop.permute.xlu0 %677
      %679 = vrot.lane.b32.xlu0 %v298, 12
      %v680 = vpop.permute.xlu0 %679
      %681 = vrot.lane.b32.xlu0 %v299, 12
      %v682 = vpop.permute.xlu0 %681
      %683 = vrot.lane.b32.xlu0 %v300, 12
      %v684 = vpop.permute.xlu0 %683
      %685 = vrot.lane.b32.xlu0 %v301, 12
      %v686 = vpop.permute.xlu0 %685
      %687 = vrot.lane.b32.xlu0 %v302, 12
      %v688 = vpop.permute.xlu0 %687
      %689 = vrot.lane.b32.xlu0 %v303, 12
      %v690 = vpop.permute.xlu0 %689
      %691 = vrot.lane.b32.xlu0 %v304, 12
      %v692 = vpop.permute.xlu0 %691
      %693 = vrot.lane.b32.xlu0 %v305, 12
      %v694 = vpop.permute.xlu0 %693
      %695 = vrot.lane.b32.xlu0 %v664, 12
      %v696 = vpop.permute.xlu0 %695
      %v698 = vunpack.c.l.b16 %v222
      %v699 = vpack.c.b16 %v698, %v698
      %v701 = vshrl.u32 %v664, 16
      %v703 = vshll.u32 %v664, 16
      %v705 = vrot.slane %v703, 1
      %v706 = vor.u32 %v701, %v705
      %v708 = vshll.u32 %v699, 16
      %v710 = vrot.slane %v708, 1
      %v711 = vsel %vm354, %v706, %v710
      %712 = vrot.lane.b32.xlu0 %v378, 16
      %v713 = vpop.permute.xlu0 %712
      %714 = vrot.lane.b32.xlu0 %v390, 16
      %v715 = vpop.permute.xlu0 %714
      %716 = vrot.lane.b32.xlu0 %v402, 16
      %v717 = vpop.permute.xlu0 %716
      %718 = vrot.lane.b32.xlu0 %v414, 16
      %v719 = vpop.permute.xlu0 %718
      %720 = vrot.lane.b32.xlu0 %v426, 16
      %v721 = vpop.permute.xlu0 %720
      %722 = vrot.lane.b32.xlu0 %v438, 16
      %v723 = vpop.permute.xlu0 %722
      %724 = vrot.lane.b32.xlu0 %v450, 16
      %v725 = vpop.permute.xlu0 %724
      %726 = vrot.lane.b32.xlu0 %v462, 16
      %v727 = vpop.permute.xlu0 %726
      %728 = vrot.lane.b32.xlu0 %v474, 16
      %v729 = vpop.permute.xlu0 %728
      %730 = vrot.lane.b32.xlu0 %v486, 16
      %v731 = vpop.permute.xlu0 %730
      %732 = vrot.lane.b32.xlu0 %v498, 16
      %v733 = vpop.permute.xlu0 %732
      %734 = vrot.lane.b32.xlu0 %v510, 16
      %v735 = vpop.permute.xlu0 %734
      %736 = vrot.lane.b32.xlu0 %v522, 16
      %v737 = vpop.permute.xlu0 %736
      %738 = vrot.lane.b32.xlu0 %v534, 16
      %v739 = vpop.permute.xlu0 %738
      %740 = vrot.lane.b32.xlu0 %v546, 16
      %v741 = vpop.permute.xlu0 %740
      %742 = vrot.lane.b32.xlu0 %v711, 16
      %v743 = vpop.permute.xlu0 %742
      %v744 = vrot.slane %v664, 1
      %v745 = vrot.slane %v699, 1
      %v746 = vsel %vm579, %v744, %v745
      %747 = vrot.lane.b32.xlu0 %v585, 20
      %v748 = vpop.permute.xlu0 %747
      %749 = vrot.lane.b32.xlu0 %v588, 20
      %v750 = vpop.permute.xlu0 %749
      %751 = vrot.lane.b32.xlu0 %v591, 20
      %v752 = vpop.permute.xlu0 %751
      %753 = vrot.lane.b32.xlu0 %v594, 20
      %v754 = vpop.permute.xlu0 %753
      %755 = vrot.lane.b32.xlu0 %v597, 20
      %v756 = vpop.permute.xlu0 %755
      %757 = vrot.lane.b32.xlu0 %v600, 20
      %v758 = vpop.permute.xlu0 %757
      %759 = vrot.lane.b32.xlu0 %v603, 20
      %v760 = vpop.permute.xlu0 %759
      %761 = vrot.lane.b32.xlu0 %v606, 20
      %v762 = vpop.permute.xlu0 %761
      %763 = vrot.lane.b32.xlu0 %v609, 20
      %v764 = vpop.permute.xlu0 %763
      %765 = vrot.lane.b32.xlu0 %v612, 20
      %v766 = vpop.permute.xlu0 %765
      %767 = vrot.lane.b32.xlu0 %v615, 20
      %v768 = vpop.permute.xlu0 %767
      %769 = vrot.lane.b32.xlu0 %v618, 20
      %v770 = vpop.permute.xlu0 %769
      %771 = vrot.lane.b32.xlu0 %v621, 20
      %v772 = vpop.permute.xlu0 %771
      %773 = vrot.lane.b32.xlu0 %v624, 20
      %v774 = vpop.permute.xlu0 %773
      %775 = vrot.lane.b32.xlu0 %v627, 20
      %v776 = vpop.permute.xlu0 %775
      %777 = vrot.lane.b32.xlu0 %v746, 20
      %v778 = vpop.permute.xlu0 %777
      %v781 = vunpack.c.l.b16 %v223
      %v782 = vunpack.c.l.b16 %v224
      %v783 = vpack.c.b16 %v782, %v781
      %784 = vrot.lane.b32.xlu0 %v292, 24
      %v785 = vpop.permute.xlu0 %784
      %786 = vrot.lane.b32.xlu0 %v293, 24
      %v787 = vpop.permute.xlu0 %786
      %788 = vrot.lane.b32.xlu0 %v294, 24
      %v789 = vpop.permute.xlu0 %788
      %790 = vrot.lane.b32.xlu0 %v295, 24
      %v791 = vpop.permute.xlu0 %790
      %792 = vrot.lane.b32.xlu0 %v296, 24
      %v793 = vpop.permute.xlu0 %792
      %794 = vrot.lane.b32.xlu0 %v297, 24
      %v795 = vpop.permute.xlu0 %794
      %796 = vrot.lane.b32.xlu0 %v298, 24
      %v797 = vpop.permute.xlu0 %796
      %798 = vrot.lane.b32.xlu0 %v299, 24
      %v799 = vpop.permute.xlu0 %798
      %800 = vrot.lane.b32.xlu0 %v300, 24
      %v801 = vpop.permute.xlu0 %800
      %802 = vrot.lane.b32.xlu0 %v301, 24
      %v803 = vpop.permute.xlu0 %802
      %804 = vrot.lane.b32.xlu0 %v302, 24
      %v805 = vpop.permute.xlu0 %804
      %806 = vrot.lane.b32.xlu0 %v303, 24
      %v807 = vpop.permute.xlu0 %806
      %808 = vrot.lane.b32.xlu0 %v304, 24
      %v809 = vpop.permute.xlu0 %808
      %810 = vrot.lane.b32.xlu0 %v305, 24
      %v811 = vpop.permute.xlu0 %810
      %812 = vrot.lane.b32.xlu0 %v664, 24
      %v813 = vpop.permute.xlu0 %812
      %814 = vrot.lane.b32.xlu0 %v783, 24
      %v815 = vpop.permute.xlu0 %814
      %v817 = vunpack.c.l.b16 %v225
      %v818 = vpack.c.b16 %v817, %v817
      %v820 = vshrl.u32 %v783, 16
      %v822 = vshll.u32 %v783, 16
      %v824 = vrot.slane %v822, 1
      %v825 = vor.u32 %v820, %v824
      %v827 = vshll.u32 %v818, 16
      %v829 = vrot.slane %v827, 1
      %v830 = vsel %vm354, %v825, %v829
      %831 = vrot.lane.b32.xlu0 %v390, 28
      %v832 = vpop.permute.xlu0 %831
      %833 = vrot.lane.b32.xlu0 %v402, 28
      %v834 = vpop.permute.xlu0 %833
      %835 = vrot.lane.b32.xlu0 %v414, 28
      %v836 = vpop.permute.xlu0 %835
      %837 = vrot.lane.b32.xlu0 %v426, 28
      %v838 = vpop.permute.xlu0 %837
      %839 = vrot.lane.b32.xlu0 %v438, 28
      %v840 = vpop.permute.xlu0 %839
      %841 = vrot.lane.b32.xlu0 %v450, 28
      %v842 = vpop.permute.xlu0 %841
      %843 = vrot.lane.b32.xlu0 %v462, 28
      %v844 = vpop.permute.xlu0 %843
      %845 = vrot.lane.b32.xlu0 %v474, 28
      %v846 = vpop.permute.xlu0 %845
      %847 = vrot.lane.b32.xlu0 %v486, 28
      %v848 = vpop.permute.xlu0 %847
      %849 = vrot.lane.b32.xlu0 %v498, 28
      %v850 = vpop.permute.xlu0 %849
      %851 = vrot.lane.b32.xlu0 %v510, 28
      %v852 = vpop.permute.xlu0 %851
      %853 = vrot.lane.b32.xlu0 %v522, 28
      %v854 = vpop.permute.xlu0 %853
      %855 = vrot.lane.b32.xlu0 %v534, 28
      %v856 = vpop.permute.xlu0 %855
      %857 = vrot.lane.b32.xlu0 %v546, 28
      %v858 = vpop.permute.xlu0 %857
      %859 = vrot.lane.b32.xlu0 %v711, 28
      %v860 = vpop.permute.xlu0 %859
      %861 = vrot.lane.b32.xlu0 %v830, 28
      %v862 = vpop.permute.xlu0 %861
      %v863 = vrot.slane %v783, 1
      %v864 = vrot.slane %v818, 1
      %v865 = vsel %vm579, %v863, %v864
      %866 = vrot.lane.b32.xlu0 %v588, 32
      %v867 = vpop.permute.xlu0 %866
      %868 = vrot.lane.b32.xlu0 %v591, 32
      %v869 = vpop.permute.xlu0 %868
      %870 = vrot.lane.b32.xlu0 %v594, 32
      %v871 = vpop.permute.xlu0 %870
      %872 = vrot.lane.b32.xlu0 %v597, 32
      %v873 = vpop.permute.xlu0 %872
      %874 = vrot.lane.b32.xlu0 %v600, 32
      %v875 = vpop.permute.xlu0 %874
      %876 = vrot.lane.b32.xlu0 %v603, 32
      %v877 = vpop.permute.xlu0 %876
      %878 = vrot.lane.b32.xlu0 %v606, 32
      %v879 = vpop.permute.xlu0 %878
      %880 = vrot.lane.b32.xlu0 %v609, 32
      %v881 = vpop.permute.xlu0 %880
      %882 = vrot.lane.b32.xlu0 %v612, 32
      %v883 = vpop.permute.xlu0 %882
      %884 = vrot.lane.b32.xlu0 %v615, 32
      %v885 = vpop.permute.xlu0 %884
      %886 = vrot.lane.b32.xlu0 %v618, 32
      %v887 = vpop.permute.xlu0 %886
      %888 = vrot.lane.b32.xlu0 %v621, 32
      %v889 = vpop.permute.xlu0 %888
      %890 = vrot.lane.b32.xlu0 %v624, 32
      %v891 = vpop.permute.xlu0 %890
      %892 = vrot.lane.b32.xlu0 %v627, 32
      %v893 = vpop.permute.xlu0 %892
      %894 = vrot.lane.b32.xlu0 %v746, 32
      %v895 = vpop.permute.xlu0 %894
      %896 = vrot.lane.b32.xlu0 %v865, 32
      %v897 = vpop.permute.xlu0 %896
      %vm898 = vcmask 31744
      %v900 = vsel %vm898, %v290, %v548
      %v902 = vsel %vm898, %v291, %v550
      %v904 = vsel %vm898, %v292, %v552
      %v906 = vsel %vm898, %v293, %v554
      %v908 = vsel %vm898, %v294, %v556
      %v910 = vsel %vm898, %v295, %v558
      %v912 = vsel %vm898, %v296, %v560
      %v914 = vsel %vm898, %v297, %v562
      %v916 = vsel %vm898, %v298, %v564
      %v918 = vsel %vm898, %v299, %v566
      %v920 = vsel %vm898, %v300, %v568
      %v922 = vsel %vm898, %v301, %v570
      %v924 = vsel %vm898, %v302, %v572
      %v926 = vsel %vm898, %v303, %v574
      %v928 = vsel %vm898, %v304, %v576
      %v930 = vsel %vm898, %v305, %v578
      %vm931 = vcmask 64512
      %v933 = vsel %vm931, %v900, %v629
      %v935 = vsel %vm931, %v902, %v631
      %v937 = vsel %vm931, %v904, %v633
      %v939 = vsel %vm931, %v906, %v635
      %v941 = vsel %vm931, %v908, %v637
      %v943 = vsel %vm931, %v910, %v639
      %v945 = vsel %vm931, %v912, %v641
      %v947 = vsel %vm931, %v914, %v643
      %v949 = vsel %vm931, %v916, %v645
      %v951 = vsel %vm931, %v918, %v647
      %v953 = vsel %vm931, %v920, %v649
      %v955 = vsel %vm931, %v922, %v651
      %v957 = vsel %vm931, %v924, %v653
      %v959 = vsel %vm931, %v926, %v655
      %v961 = vsel %vm931, %v928, %v657
      %v963 = vsel %vm931, %v930, %v659
      %vm964 = vcmask 97280
      %v966 = vsel %vm964, %v933, %v666
      %v968 = vsel %vm964, %v935, %v668
      %v970 = vsel %vm964, %v937, %v670
      %v972 = vsel %vm964, %v939, %v672
      %v974 = vsel %vm964, %v941, %v674
      %v976 = vsel %vm964, %v943, %v676
      %v978 = vsel %vm964, %v945, %v678
      %v980 = vsel %vm964, %v947, %v680
      %v982 = vsel %vm964, %v949, %v682
      %v984 = vsel %vm964, %v951, %v684
      %v986 = vsel %vm964, %v953, %v686
      %v988 = vsel %vm964, %v955, %v688
      %v990 = vsel %vm964, %v957, %v690
      %v992 = vsel %vm964, %v959, %v692
      %v994 = vsel %vm964, %v961, %v694
      %v996 = vsel %vm964, %v963, %v696
      %vm997 = vcmask 130048
      %v999 = vsel %vm997, %v966, %v713
      %v1001 = vsel %vm997, %v968, %v715
      %v1003 = vsel %vm997, %v970, %v717
      %v1005 = vsel %vm997, %v972, %v719
      %v1007 = vsel %vm997, %v974, %v721
      %v1009 = vsel %vm997, %v976, %v723
      %v1011 = vsel %vm997, %v978, %v725
      %v1013 = vsel %vm997, %v980, %v727
      %v1015 = vsel %vm997, %v982, %v729
      %v1017 = vsel %vm997, %v984, %v731
      %v1019 = vsel %vm997, %v986, %v733
      %v1021 = vsel %vm997, %v988, %v735
      %v1023 = vsel %vm997, %v990, %v737
      %v1025 = vsel %vm997, %v992, %v739
      %v1027 = vsel %vm997, %v994, %v741
      %v1029 = vsel %vm997, %v996, %v743
      %vm1030 = vcmask 162816
      %v1032 = vsel %vm1030, %v999, %v748
      %v1034 = vsel %vm1030, %v1001, %v750
      %v1036 = vsel %vm1030, %v1003, %v752
      %v1038 = vsel %vm1030, %v1005, %v754
      %v1040 = vsel %vm1030, %v1007, %v756
      %v1042 = vsel %vm1030, %v1009, %v758
      %v1044 = vsel %vm1030, %v1011, %v760
      %v1046 = vsel %vm1030, %v1013, %v762
      %v1048 = vsel %vm1030, %v1015, %v764
      %v1050 = vsel %vm1030, %v1017, %v766
      %v1052 = vsel %vm1030, %v1019, %v768
      %v1054 = vsel %vm1030, %v1021, %v770
      %v1056 = vsel %vm1030, %v1023, %v772
      %v1058 = vsel %vm1030, %v1025, %v774
      %v1060 = vsel %vm1030, %v1027, %v776
      %v1062 = vsel %vm1030, %v1029, %v778
      %vm1063 = vcmask 195584
      %v1065 = vsel %vm1063, %v1032, %v785
      %v1067 = vsel %vm1063, %v1034, %v787
      %v1069 = vsel %vm1063, %v1036, %v789
      %v1071 = vsel %vm1063, %v1038, %v791
      %v1073 = vsel %vm1063, %v1040, %v793
      %v1075 = vsel %vm1063, %v1042, %v795
      %v1077 = vsel %vm1063, %v1044, %v797
      %v1079 = vsel %vm1063, %v1046, %v799
      %v1081 = vsel %vm1063, %v1048, %v801
      %v1083 = vsel %vm1063, %v1050, %v803
      %v1085 = vsel %vm1063, %v1052, %v805
      %v1087 = vsel %vm1063, %v1054, %v807
      %v1089 = vsel %vm1063, %v1056, %v809
      %v1091 = vsel %vm1063, %v1058, %v811
      %v1093 = vsel %vm1063, %v1060, %v813
      %v1095 = vsel %vm1063, %v1062, %v815
      %vm1096 = vcmask 228352
      %v1098 = vsel %vm1096, %v1065, %v832
      %v1100 = vsel %vm1096, %v1067, %v834
      %v1102 = vsel %vm1096, %v1069, %v836
      %v1104 = vsel %vm1096, %v1071, %v838
      %v1106 = vsel %vm1096, %v1073, %v840
      %v1108 = vsel %vm1096, %v1075, %v842
      %v1110 = vsel %vm1096, %v1077, %v844
      %v1112 = vsel %vm1096, %v1079, %v846
      %v1114 = vsel %vm1096, %v1081, %v848
      %v1116 = vsel %vm1096, %v1083, %v850
      %v1118 = vsel %vm1096, %v1085, %v852
      %v1120 = vsel %vm1096, %v1087, %v854
      %v1122 = vsel %vm1096, %v1089, %v856
      %v1124 = vsel %vm1096, %v1091, %v858
      %v1126 = vsel %vm1096, %v1093, %v860
      %v1128 = vsel %vm1096, %v1095, %v862
      %vm1129 = vcmask 261120
      %v1131 = vsel %vm1129, %v1098, %v867
      %v1133 = vsel %vm1129, %v1100, %v869
      %v1135 = vsel %vm1129, %v1102, %v871
      %v1137 = vsel %vm1129, %v1104, %v873
      %v1139 = vsel %vm1129, %v1106, %v875
      %v1141 = vsel %vm1129, %v1108, %v877
      %v1143 = vsel %vm1129, %v1110, %v879
      %v1145 = vsel %vm1129, %v1112, %v881
      %v1147 = vsel %vm1129, %v1114, %v883
      %v1149 = vsel %vm1129, %v1116, %v885
      %v1151 = vsel %vm1129, %v1118, %v887
      %v1153 = vsel %vm1129, %v1120, %v889
      %v1155 = vsel %vm1129, %v1122, %v891
      %v1157 = vsel %vm1129, %v1124, %v893
      %v1159 = vsel %vm1129, %v1126, %v895
      %v1161 = vsel %vm1129, %v1128, %v897
      %v1162 = vld [vmem:[%s1] sm:$0xf]
      %v1163 = vld [vmem:[%s1 + $0x4] sm:$0xf]
      %v1164 = vld [vmem:[%s1 + $0x8] sm:$0xf]
      %v1165 = vld [vmem:[%s1 + $0xc] sm:$0xf]
      %v1166 = vld [vmem:[%s1 + $0x10] sm:$0x3]
      %v1167 = vld [vmem:[%s2] sm:$0x1]
      %v1169 = vperm.slane %v1167, 0
      %v1176 = vunpack.c.l.b16 %v1162
      %v1177 = vunpack.c.l.b16 %v1163
      %v1178 = vunpack.c.l.b16 %v1164
      %v1179 = vunpack.c.l.b16 %v1165
      %v1180 = vunpack.c.l.b16 %v1166
      %v1181 = vpack.c.b16 %v1177, %v1176
      %v1182 = vpack.c.b16 %v1179, %v1178
      %v1183 = vpack.c.b16 %v1180, %v1180
      %vm1186 = vcmask 293888
      %v1187 = vsel %vm1186, %v1131, 0
      %v1189 = vsel %vm1186, %v1133, 0
      %v1191 = vsel %vm1186, %v1135, 0
      %v1193 = vsel %vm1186, %v1137, 0
      %v1195 = vsel %vm1186, %v1139, 0
      %v1197 = vsel %vm1186, %v1141, 0
      %v1199 = vsel %vm1186, %v1143, 0
      %v1201 = vsel %vm1186, %v1145, 0
      %v1203 = vsel %vm1186, %v1147, 0
      %v1205 = vsel %vm1186, %v1149, 0
      %v1207 = vsel %vm1186, %v1151, 0
      %v1209 = vsel %vm1186, %v1153, 0
      %v1211 = vsel %vm1186, %v1155, 0
      %v1213 = vsel %vm1186, %v1157, 0
      %v1215 = vsel %vm1186, %v1159, 0
      %v1217 = vsel %vm1186, %v1161, 0
      %vm1219 = vcmask 1041408
      %v1221 = vsel %vm1219, %v1183, 0
      %1223 = vmatpush.bf16.msra.mxu0 0
      %1224 = vmatpush.bf16.msra.mxu0 0
      %1225 = vmatpush.bf16.msra.mxu0 0
      %1226 = vmatpush.bf16.msra.mxu0 0
      %1227 = vmatpush.bf16.msra.mxu0 0
      %1228 = vmatpush.bf16.msra.mxu0 %v1221
      %1229 = vmatpush.bf16.msra.mxu0 %v1182
      %1230 = vmatpush.bf16.msra.mxu0 %v1181
      %1231 = vmatmul.bf16.gmra.mxu0 %v1187
      %v1232 = vpop.f32.mrf.mxu0
      %v1233 = vadd.f32 %v1169, %v1232
      %v1234 = vpop.f32.mrf.mxu0
      %v1235 = vadd.f32 %v1169, %v1234
      %1236 = vmatmul.bf16.gmra.mxu0 %v1189
      %v1237 = vpop.f32.mrf.mxu0
      %v1238 = vadd.f32 %v1169, %v1237
      %v1239 = vpop.f32.mrf.mxu0
      %v1240 = vadd.f32 %v1169, %v1239
      %1241 = vmatmul.bf16.gmra.mxu0 %v1191
      %v1242 = vpop.f32.mrf.mxu0
      %v1243 = vadd.f32 %v1169, %v1242
      %v1244 = vpop.f32.mrf.mxu0
      %v1245 = vadd.f32 %v1169, %v1244
      %1246 = vmatmul.bf16.gmra.mxu0 %v1193
      %v1247 = vpop.f32.mrf.mxu0
      %v1248 = vadd.f32 %v1169, %v1247
      %v1249 = vpop.f32.mrf.mxu0
      %v1250 = vadd.f32 %v1169, %v1249
      %1251 = vmatmul.bf16.gmra.mxu0 %v1195
      %v1252 = vpop.f32.mrf.mxu0
      %v1253 = vadd.f32 %v1169, %v1252
      %v1254 = vpop.f32.mrf.mxu0
      %v1255 = vadd.f32 %v1169, %v1254
      %1256 = vmatmul.bf16.gmra.mxu0 %v1197
      %v1257 = vpop.f32.mrf.mxu0
      %v1258 = vadd.f32 %v1169, %v1257
      %v1259 = vpop.f32.mrf.mxu0
      %v1260 = vadd.f32 %v1169, %v1259
      %1261 = vmatmul.bf16.gmra.mxu0 %v1199
      %v1262 = vpop.f32.mrf.mxu0
      %v1263 = vadd.f32 %v1169, %v1262
      %v1264 = vpop.f32.mrf.mxu0
      %v1265 = vadd.f32 %v1169, %v1264
      %1266 = vmatmul.bf16.gmra.mxu0 %v1201
      %v1267 = vpop.f32.mrf.mxu0
      %v1268 = vadd.f32 %v1169, %v1267
      %v1269 = vpop.f32.mrf.mxu0
      %v1270 = vadd.f32 %v1169, %v1269
      %1271 = vmatmul.bf16.gmra.mxu0 %v1203
      %v1272 = vpop.f32.mrf.mxu0
      %v1273 = vadd.f32 %v1169, %v1272
      %v1274 = vpop.f32.mrf.mxu0
      %v1275 = vadd.f32 %v1169, %v1274
      %1276 = vmatmul.bf16.gmra.mxu0 %v1205
      %v1277 = vpop.f32.mrf.mxu0
      %v1278 = vadd.f32 %v1169, %v1277
      %v1279 = vpop.f32.mrf.mxu0
      %v1280 = vadd.f32 %v1169, %v1279
      %1281 = vmatmul.bf16.gmra.mxu0 %v1207
      %v1282 = vpop.f32.mrf.mxu0
      %v1283 = vadd.f32 %v1169, %v1282
      %v1284 = vpop.f32.mrf.mxu0
      %v1285 = vadd.f32 %v1169, %v1284
      %1286 = vmatmul.bf16.gmra.mxu0 %v1209
      %v1287 = vpop.f32.mrf.mxu0
      %v1288 = vadd.f32 %v1169, %v1287
      %v1289 = vpop.f32.mrf.mxu0
      %v1290 = vadd.f32 %v1169, %v1289
      %1291 = vmatmul.bf16.gmra.mxu0 %v1211
      %v1292 = vpop.f32.mrf.mxu0
      %v1293 = vadd.f32 %v1169, %v1292
      %v1294 = vpop.f32.mrf.mxu0
      %v1295 = vadd.f32 %v1169, %v1294
      %1296 = vmatmul.bf16.gmra.mxu0 %v1213
      %v1297 = vpop.f32.mrf.mxu0
      %v1298 = vadd.f32 %v1169, %v1297
      %v1299 = vpop.f32.mrf.mxu0
      %v1300 = vadd.f32 %v1169, %v1299
      %1301 = vmatmul.bf16.gmra.mxu0 %v1215
      %v1302 = vpop.f32.mrf.mxu0
      %v1303 = vadd.f32 %v1169, %v1302
      %v1304 = vpop.f32.mrf.mxu0
      %v1305 = vadd.f32 %v1169, %v1304
      %1306 = vmatmul.bf16.gmra.mxu0 %v1217
      %v1307 = vpop.f32.mrf.mxu0
      %v1308 = vadd.f32 %v1169, %v1307
      %v1309 = vpop.f32.mrf.mxu0
      %v1310 = vadd.f32 %v1169, %v1309
      %1311 = vdwg.mxu0
      %v1312 = vmax.f32 %v1233, 0.0
      %v1313 = vmax.f32 %v1235, 0.0
      %v1314 = vmax.f32 %v1238, 0.0
      %v1315 = vmax.f32 %v1240, 0.0
      %v1316 = vmax.f32 %v1243, 0.0
      %v1317 = vmax.f32 %v1245, 0.0
      %v1318 = vmax.f32 %v1248, 0.0
      %v1319 = vmax.f32 %v1250, 0.0
      %v1320 = vmax.f32 %v1253, 0.0
      %v1321 = vmax.f32 %v1255, 0.0
      %v1322 = vmax.f32 %v1258, 0.0
      %v1323 = vmax.f32 %v1260, 0.0
      %v1324 = vmax.f32 %v1263, 0.0
      %v1325 = vmax.f32 %v1265, 0.0
      %v1326 = vmax.f32 %v1268, 0.0
      %v1327 = vmax.f32 %v1270, 0.0
      %v1328 = vmax.f32 %v1273, 0.0
      %v1329 = vmax.f32 %v1275, 0.0
      %v1330 = vmax.f32 %v1278, 0.0
      %v1331 = vmax.f32 %v1280, 0.0
      %v1332 = vmax.f32 %v1283, 0.0
      %v1333 = vmax.f32 %v1285, 0.0
      %v1334 = vmax.f32 %v1288, 0.0
      %v1335 = vmax.f32 %v1290, 0.0
      %v1336 = vmax.f32 %v1293, 0.0
      %v1337 = vmax.f32 %v1295, 0.0
      %v1338 = vmax.f32 %v1298, 0.0
      %v1339 = vmax.f32 %v1300, 0.0
      %v1340 = vmax.f32 %v1303, 0.0
      %v1341 = vmax.f32 %v1305, 0.0
      %v1342 = vmax.f32 %v1308, 0.0
      %v1343 = vmax.f32 %v1310, 0.0
      %v1344 = vpack.c.bf16 %v1312, %v1312
      %v1345 = vpack.c.bf16 %v1313, %v1313
      %v1346 = vpack.c.bf16 %v1314, %v1314
      %v1347 = vpack.c.bf16 %v1315, %v1315
      %v1348 = vpack.c.bf16 %v1316, %v1316
      %v1349 = vpack.c.bf16 %v1317, %v1317
      %v1350 = vpack.c.bf16 %v1318, %v1318
      %v1351 = vpack.c.bf16 %v1319, %v1319
      %v1352 = vpack.c.bf16 %v1320, %v1320
      %v1353 = vpack.c.bf16 %v1321, %v1321
      %v1354 = vpack.c.bf16 %v1322, %v1322
      %v1355 = vpack.c.bf16 %v1323, %v1323
      %v1356 = vpack.c.bf16 %v1324, %v1324
      %v1357 = vpack.c.bf16 %v1325, %v1325
      %v1358 = vpack.c.bf16 %v1326, %v1326
      %v1359 = vpack.c.bf16 %v1327, %v1327
      %v1360 = vpack.c.bf16 %v1328, %v1328
      %v1361 = vpack.c.bf16 %v1329, %v1329
      %v1362 = vpack.c.bf16 %v1330, %v1330
      %v1363 = vpack.c.bf16 %v1331, %v1331
      %v1364 = vpack.c.bf16 %v1332, %v1332
      %v1365 = vpack.c.bf16 %v1333, %v1333
      %v1366 = vpack.c.bf16 %v1334, %v1334
      %v1367 = vpack.c.bf16 %v1335, %v1335
      %v1368 = vpack.c.bf16 %v1336, %v1336
      %v1369 = vpack.c.bf16 %v1337, %v1337
      %v1370 = vpack.c.bf16 %v1338, %v1338
      %v1371 = vpack.c.bf16 %v1339, %v1339
      %v1372 = vpack.c.bf16 %v1340, %v1340
      %v1373 = vpack.c.bf16 %v1341, %v1341
      %v1374 = vpack.c.bf16 %v1342, %v1342
      %v1375 = vpack.c.bf16 %v1343, %v1343
      %vm1376 = vcmask 125952
      %1377 = vst.msk [vmem:[%s170] sm:$0xf] %vm1376, %v1344
      %1378 = vst.msk [vmem:[%s170 + $0x4] sm:$0xf] %vm1376, %v1345
      %1379 = vst.msk [vmem:[%s170 + $0x8] sm:$0xf] %vm1376, %v1346
      %1380 = vst.msk [vmem:[%s170 + $0xc] sm:$0xf] %vm1376, %v1347
      %1381 = vst.msk [vmem:[%s170 + $0x10] sm:$0xf] %vm1376, %v1348
      %1382 = vst.msk [vmem:[%s170 + $0x14] sm:$0xf] %vm1376, %v1349
      %1383 = vst.msk [vmem:[%s170 + $0x18] sm:$0xf] %vm1376, %v1350
      %1384 = vst.msk [vmem:[%s170 + $0x1c] sm:$0xf] %vm1376, %v1351
      %1385 = vst.msk [vmem:[%s170 + $0x20] sm:$0xf] %vm1376, %v1352
      %1386 = vst.msk [vmem:[%s170 + $0x24] sm:$0xf] %vm1376, %v1353
      %1387 = vst.msk [vmem:[%s170 + $0x28] sm:$0xf] %vm1376, %v1354
      %1388 = vst.msk [vmem:[%s170 + $0x2c] sm:$0xf] %vm1376, %v1355
      %1389 = vst.msk [vmem:[%s170 + $0x30] sm:$0xf] %vm1376, %v1356
      %1390 = vst.msk [vmem:[%s170 + $0x34] sm:$0xf] %vm1376, %v1357
      %1391 = vst.msk [vmem:[%s170 + $0x38] sm:$0xf] %vm1376, %v1358
      %1392 = vst.msk [vmem:[%s170 + $0x3c] sm:$0xf] %vm1376, %v1359
      %1393 = vst.msk [vmem:[%s170 + $0x40] sm:$0xf] %vm1376, %v1360
      %1394 = vst.msk [vmem:[%s170 + $0x44] sm:$0xf] %vm1376, %v1361
      %1395 = vst.msk [vmem:[%s170 + $0x48] sm:$0xf] %vm1376, %v1362
      %1396 = vst.msk [vmem:[%s170 + $0x4c] sm:$0xf] %vm1376, %v1363
      %1397 = vst.msk [vmem:[%s170 + $0x50] sm:$0xf] %vm1376, %v1364
      %1398 = vst.msk [vmem:[%s170 + $0x54] sm:$0xf] %vm1376, %v1365
      %1399 = vst.msk [vmem:[%s170 + $0x58] sm:$0xf] %vm1376, %v1366
      %1400 = vst.msk [vmem:[%s170 + $0x5c] sm:$0xf] %vm1376, %v1367
      %1401 = vst.msk [vmem:[%s170 + $0x60] sm:$0xf] %vm1376, %v1368
      %1402 = vst.msk [vmem:[%s170 + $0x64] sm:$0xf] %vm1376, %v1369
      %1403 = vst.msk [vmem:[%s170 + $0x68] sm:$0xf] %vm1376, %v1370
      %1404 = vst.msk [vmem:[%s170 + $0x6c] sm:$0xf] %vm1376, %v1371
      %1405 = vst.msk [vmem:[%s170 + $0x70] sm:$0xf] %vm1376, %v1372
      %1406 = vst.msk [vmem:[%s170 + $0x74] sm:$0xf] %vm1376, %v1373
      %1407 = vst.msk [vmem:[%s170 + $0x78] sm:$0xf] %vm1376, %v1374
      %1408 = vst.msk [vmem:[%s170 + $0x7c] sm:$0xf] %vm1376, %v1375
      %p1409 = scmp.lt.s32.totalorder %s14, 1
      %s1410 = scalar_select %p1409, %s14, 1
      %s1411 = smul.addr %s1410, 32
      %s1412 = smul.addr %s1411, 4
      %s1413 = scalar_lea.vmem %s3, %s1412
      // Predicated region
      $region33: #{tpu_custom_call.1} parent=31 // pred_check
        %p1414 = pneg %p100
      $region34: #{tpu_custom_call.1} parent=31 // pred_check_branch
        %1416 = sbr.rel (%p1414) target = $region36
      $region35: #{tpu_custom_call.1} parent=31 // pred_region
        _
      $region36: #{tpu_custom_call.1} parent=31 // pred_fallthru
        _
    $region32: #{tpu_custom_call.1} parent=5 // pred_fallthru
      _
    %p1417 = scmp.le.s32.totalorder 2, %s9
    // Predicated region
    $region37: #{tpu_custom_call.1} parent=5 // pred_check
      %p1418 = pneg %p1417
    $region38: #{tpu_custom_call.1} parent=5 // pred_check_branch
      %1420 = sbr.rel (%p1418) target = $region40
    $region39: #{tpu_custom_call.1} parent=5 // pred_region
      %s1421 = ssub.s32 %s9, 2
      // Predicated region
      $region41: #{tpu_custom_call.1} parent=39 // pred_check
        %p1422 = pneg %p106
      $region42: #{tpu_custom_call.1} parent=39 // pred_check_branch
        %1424 = sbr.rel (%p1422) target = $region44
      $region43: #{tpu_custom_call.1} parent=39 // pred_region
        %p1425 = scmp.lt.s32.totalorder %s15, 1
        %s1426 = scalar_select %p1425, %s15, 1
        %s1427 = smul.addr %s1426, 32
        %s1428 = smul.addr %s1427, 4
        %s1429 = scalar_lea.vmem %s3, %s1428
      $region44: #{tpu_custom_call.1} parent=39 // pred_fallthru
        _
    $region40: #{tpu_custom_call.1} parent=5 // pred_fallthru
      _
  $region6: #{tpu_custom_call.1} parent=0 // loop_footer
    %s13 = sadd.s32 1, %s9
  $region7: #{tpu_custom_call.1} parent=0 // loop_footer_branch
    %8 = sbr.rel target = $region3
  $region8: #{tpu_custom_call.1} parent=0 // loop_exit
    _

</llo_original>
